<compile_context>
chip_gen: v7x
topology: tpu7x:2x2x1
jax: 0.10.0
libtpu: 0.0.40
codegen_flags: <defaults>
</compile_context>

<pallas_src>
import functools

import jax
import jax.numpy as jnp
from jax import lax
from jax.experimental import pallas as pl
from jax.experimental.pallas import tpu as pltpu

NEG_INF = -1e9
LN_EPS = 1e-5
_ROW_TILE_TARGET = 512


def _vmem_limit_bytes():
    """~3/4 of physical VMEM (96 MiB on v5e/v6e, 48 MiB on v7x); safe fallback."""
    try:
        cap = pltpu.get_tpu_info().vmem_capacity_bytes
        return int(cap * 3 // 4)
    except Exception:
        return 48 * 1024 * 1024


_VMEM_LIMIT = _vmem_limit_bytes()
_PAR1 = pltpu.CompilerParams(dimension_semantics=("parallel",),
                             vmem_limit_bytes=_VMEM_LIMIT)
_PAR2 = pltpu.CompilerParams(dimension_semantics=("parallel", "parallel"),
                             vmem_limit_bytes=_VMEM_LIMIT)


def _round_up(n, m):
    return ((n + m - 1) // m) * m


def _row_plan(n, target=_ROW_TILE_TARGET):
    """Return (row_tile, padded_row_count).

    Prefers an exact multiple-of-8 divisor of n (no padding); otherwise pads n
    up to a multiple of a large tile so the kernel stays pipelined instead of
    falling back to one giant un-pipelined block.
    """
    if n <= target:
        t = _round_up(n, 8)
        return t, t
    t = (target // 8) * 8
    while t >= 256:
        if n % t == 0:
            return t, n
        t -= 8
    t = (target // 8) * 8
    return t, _round_up(n, t)


def _pick_divisor_tile(n, target=256):
    """Largest multiple-of-8 divisor of n <= target (else full n). Used for T."""
    if n <= target:
        return n
    t = (target // 8) * 8
    while t >= 8:
        if n % t == 0:
            return t
        t -= 8
    return n


def _pad_rows(a, n_to):
    n = a.shape[0]
    if n_to == n:
        return a
    pad = [(0, n_to - n)] + [(0, 0)] * (a.ndim - 1)
    return jnp.pad(a, pad)


def _layernorm(h, g, b, eps):
    mu = jnp.mean(h, axis=-1, keepdims=True)
    var = jnp.mean(jnp.square(h - mu), axis=-1, keepdims=True)
    return (h - mu) * jax.lax.rsqrt(var + eps) * g + b


# ----------------------------- dense kernels --------------------------------

def _linear_kernel(x_ref, w_ref, b_ref, o_ref, *, activation):
    y = jnp.dot(x_ref[...], w_ref[...], preferred_element_type=jnp.float32) + b_ref[...]
    if activation == "relu":
        y = jnp.maximum(y, 0.0)
    o_ref[...] = y.astype(o_ref.dtype)


def linear(x, w, b, activation=None):
    """x: (N, Din) @ w: (Din, Dout) + b -> (N, Dout). Row-tiled; weights resident."""
    N, Din = x.shape
    Dout = w.shape[1]
    tn, Np = _row_plan(N)
    xp = _pad_rows(x, Np)
    out = pl.pallas_call(
        functools.partial(_linear_kernel, activation=activation),
        out_shape=jax.ShapeDtypeStruct((Np, Dout), x.dtype),
        grid=(Np // tn,),
        in_specs=[
            pl.BlockSpec((tn, Din), lambda i: (i, 0)),
            pl.BlockSpec((Din, Dout), lambda i: (0, 0)),
            pl.BlockSpec((1, Dout), lambda i: (0, 0)),
        ],
        out_specs=pl.BlockSpec((tn, Dout), lambda i: (i, 0)),
        compiler_params=_PAR1,
    )(xp, w, b)
    return out if Np == N else out[:N]


def _q_and_ne_kernel(x_ref, wq_ref, bq_ref, w1_ref, b1_ref, w2_ref, b2_ref,
                     q_ref, ne_ref):
    x = x_ref[...]
    q = jnp.dot(x, wq_ref[...], preferred_element_type=jnp.float32) + bq_ref[...]
    q_ref[...] = q.astype(q_ref.dtype)
    h = jnp.maximum(jnp.dot(x, w1_ref[...], preferred_element_type=jnp.float32)
                    + b1_ref[...], 0.0)
    ne = jnp.dot(h.astype(w2_ref.dtype), w2_ref[...],
                 preferred_element_type=jnp.float32) + b2_ref[...]
    ne_ref[...] = ne.astype(ne_ref.dtype)


def q_proj_and_ne_head(x, wq, bq, w1, b1, w2, b2):
    """Fused encoder-attn Q projection + NE head fc2(relu(fc1(x))); one read of x."""
    N, D = x.shape
    Dq, P, V = wq.shape[1], w1.shape[1], w2.shape[1]
    tn, Np = _row_plan(N)
    xp = _pad_rows(x, Np)
    q, ne = pl.pallas_call(
        _q_and_ne_kernel,
        out_shape=(jax.ShapeDtypeStruct((Np, Dq), x.dtype),
                   jax.ShapeDtypeStruct((Np, V), jnp.float32)),
        grid=(Np // tn,),
        in_specs=[
            pl.BlockSpec((tn, D), lambda i: (i, 0)),
            pl.BlockSpec((D, Dq), lambda i: (0, 0)),
            pl.BlockSpec((1, Dq), lambda i: (0, 0)),
            pl.BlockSpec((D, P), lambda i: (0, 0)),
            pl.BlockSpec((1, P), lambda i: (0, 0)),
            pl.BlockSpec((P, V), lambda i: (0, 0)),
            pl.BlockSpec((1, V), lambda i: (0, 0)),
        ],
        out_specs=(pl.BlockSpec((tn, Dq), lambda i: (i, 0)),
                   pl.BlockSpec((tn, V), lambda i: (i, 0))),
        compiler_params=_PAR1,
    )(xp, wq, bq, w1, b1, w2, b2)
    if Np != N:
        q, ne = q[:N], ne[:N]
    return q, ne


def _proj_proj_kernel(x_ref, w1_ref, b1_ref, w2_ref, b2_ref, y1_ref, y2_ref):
    y1 = jnp.dot(x_ref[...], w1_ref[...], preferred_element_type=jnp.float32) + b1_ref[...]
    y1_ref[...] = y1.astype(y1_ref.dtype)
    y2 = jnp.dot(y1.astype(w2_ref.dtype), w2_ref[...],
                 preferred_element_type=jnp.float32) + b2_ref[...]
    y2_ref[...] = y2.astype(y2_ref.dtype)


def proj_then_proj(x, w1, b1, w2, b2):
    """Fused enc-attn out-projection + mention-attn Q projection (back-to-back)."""
    N, Din = x.shape
    D1, D2 = w1.shape[1], w2.shape[1]
    tn, Np = _row_plan(N)
    xp = _pad_rows(x, Np)
    y1, y2 = pl.pallas_call(
        _proj_proj_kernel,
        out_shape=(jax.ShapeDtypeStruct((Np, D1), x.dtype),
                   jax.ShapeDtypeStruct((Np, D2), x.dtype)),
        grid=(Np // tn,),
        in_specs=[
            pl.BlockSpec((tn, Din), lambda i: (i, 0)),
            pl.BlockSpec((Din, D1), lambda i: (0, 0)),
            pl.BlockSpec((1, D1), lambda i: (0, 0)),
            pl.BlockSpec((D1, D2), lambda i: (0, 0)),
            pl.BlockSpec((1, D2), lambda i: (0, 0)),
        ],
        out_specs=(pl.BlockSpec((tn, D1), lambda i: (i, 0)),
                   pl.BlockSpec((tn, D2), lambda i: (i, 0))),
        compiler_params=_PAR1,
    )(xp, w1, b1, w2, b2)
    if Np != N:
        y1, y2 = y1[:N], y2[:N]
    return y1, y2


def _proj_add_ln_kernel(o_ref, w_ref, b_ref, res_ref, g_ref, be_ref, out_ref, *, eps):
    y = jnp.dot(o_ref[...], w_ref[...], preferred_element_type=jnp.float32) + b_ref[...]
    h = y + res_ref[...].astype(jnp.float32)
    out_ref[...] = _layernorm(h, g_ref[...], be_ref[...], eps).astype(out_ref.dtype)


def proj_add_layernorm(o, w, b, res, gamma, beta, eps=LN_EPS):
    """Fused attention out-projection + residual add + LayerNorm."""
    N, D = res.shape
    Dk = o.shape[1]
    tn, Np = _row_plan(N)
    out = pl.pallas_call(
        functools.partial(_proj_add_ln_kernel, eps=eps),
        out_shape=jax.ShapeDtypeStruct((Np, D), res.dtype),
        grid=(Np // tn,),
        in_specs=[
            pl.BlockSpec((tn, Dk), lambda i: (i, 0)),
            pl.BlockSpec((Dk, D), lambda i: (0, 0)),
            pl.BlockSpec((1, D), lambda i: (0, 0)),
            pl.BlockSpec((tn, D), lambda i: (i, 0)),
            pl.BlockSpec((1, D), lambda i: (0, 0)),
            pl.BlockSpec((1, D), lambda i: (0, 0)),
        ],
        out_specs=pl.BlockSpec((tn, D), lambda i: (i, 0)),
        compiler_params=_PAR1,
    )(_pad_rows(o, Np), w, b, _pad_rows(res, Np), gamma, beta)
    return out if Np == N else out[:N]


def _proj_select_add_ln_kernel(o_ref, w_ref, b_ref, cond_ref, ctx_ref, res_ref,
                               g_ref, be_ref, out_ref, *, eps):
    xm = jnp.dot(o_ref[...], w_ref[...], preferred_element_type=jnp.float32) + b_ref[...]
    x = jnp.where(cond_ref[...] != 0, xm, ctx_ref[...].astype(jnp.float32))
    h = x + res_ref[...].astype(jnp.float32)
    out_ref[...] = _layernorm(h, g_ref[...], be_ref[...], eps).astype(out_ref.dtype)


def proj_select_add_layernorm(o_mention, w, b, cond, x_ctx, res, gamma, beta, eps=LN_EPS):
    """Fused mention out-projection + where(cond, x_mention, x_ctx) + residual + LN."""
    N, D = x_ctx.shape
    Dk = o_mention.shape[1]
    tn, Np = _row_plan(N)
    out = pl.pallas_call(
        functools.partial(_proj_select_add_ln_kernel, eps=eps),
        out_shape=jax.ShapeDtypeStruct((Np, D), x_ctx.dtype),
        grid=(Np // tn,),
        in_specs=[
            pl.BlockSpec((tn, Dk), lambda i: (i, 0)),
            pl.BlockSpec((Dk, D), lambda i: (0, 0)),
            pl.BlockSpec((1, D), lambda i: (0, 0)),
            pl.BlockSpec((tn, 1), lambda i: (i, 0)),
            pl.BlockSpec((tn, D), lambda i: (i, 0)),
            pl.BlockSpec((tn, D), lambda i: (i, 0)),
            pl.BlockSpec((1, D), lambda i: (0, 0)),
            pl.BlockSpec((1, D), lambda i: (0, 0)),
        ],
        out_specs=pl.BlockSpec((tn, D), lambda i: (i, 0)),
        compiler_params=_PAR1,
    )(_pad_rows(o_mention, Np), w, b, _pad_rows(cond, Np),
      _pad_rows(x_ctx, Np), _pad_rows(res, Np), gamma, beta)
    return out if Np == N else out[:N]


def _ffn_add_ln_kernel(x_ref, w1_ref, b1_ref, w2_ref, b2_ref, g_ref, be_ref,
                       out_ref, *, eps):
    x = x_ref[...]
    h = jnp.maximum(jnp.dot(x, w1_ref[...], preferred_element_type=jnp.float32)
                    + b1_ref[...], 0.0)
    y = jnp.dot(h.astype(w2_ref.dtype), w2_ref[...],
                preferred_element_type=jnp.float32) + b2_ref[...]
    out_ref[...] = _layernorm(y + x.astype(jnp.float32), g_ref[...], be_ref[...],
                              eps).astype(out_ref.dtype)


def ffn_add_layernorm(x, w1, b1, w2, b2, gamma, beta, eps=LN_EPS):
    """fc2(relu(fc1(x))) + x, then LayerNorm; FFN intermediate stays in VMEM."""
    N, D = x.shape
    F = w1.shape[1]
    tn, Np = _row_plan(N)   # 512-class tiles (review: restore from 256)
    out = pl.pallas_call(
        functools.partial(_ffn_add_ln_kernel, eps=eps),
        out_shape=jax.ShapeDtypeStruct((Np, D), x.dtype),
        grid=(Np // tn,),
        in_specs=[
            pl.BlockSpec((tn, D), lambda i: (i, 0)),
            pl.BlockSpec((D, F), lambda i: (0, 0)),
            pl.BlockSpec((1, F), lambda i: (0, 0)),
            pl.BlockSpec((F, D), lambda i: (0, 0)),
            pl.BlockSpec((1, D), lambda i: (0, 0)),
            pl.BlockSpec((1, D), lambda i: (0, 0)),
            pl.BlockSpec((1, D), lambda i: (0, 0)),
        ],
        out_specs=pl.BlockSpec((tn, D), lambda i: (i, 0)),
        compiler_params=_PAR1,
    )(_pad_rows(x, Np), w1, b1, w2, b2, gamma, beta)
    return out if Np == N else out[:N]


# ----------------------------- attention kernels -----------------------------

def _attn_kernel(*refs, num_heads, head_dim, scale, q_off, k_off, v_off,
                 has_amask, has_pad):
    """One (batch, q-tile) grid step, all heads.

    q_ref:  (1, tq, Wq)  — query rows (column offset q_off selects Q).
    kv_ref: (1, S,  Wkv) — key/value rows (offsets k_off / v_off select K / V).
    optional amask_ref (tq, S) and pad_ref (1, 1, S), both additive f32.
    Output: one lane-dense (tq, D) store (heads concatenated in registers).
    """
    idx = 0
    q_ref = refs[idx]; idx += 1
    kv_ref = refs[idx]; idx += 1
    amask_ref = None
    pad_ref = None
    if has_amask:
        amask_ref = refs[idx]; idx += 1
    if has_pad:
        pad_ref = refs[idx]; idx += 1
    o_ref = refs[idx]

    q_all = q_ref[0]    # (tq, Wq)
    kv_all = kv_ref[0]  # (S, Wkv)

    # Hoist the combined additive mask out of the head loop (review item).
    m = None
    if amask_ref is not None:
        m = amask_ref[...]
    if pad_ref is not None:
        p = pad_ref[0]                      # (1, S), broadcasts over rows
        m = p if m is None else m + p

    # TODO(synk): for large num_heads switch to lax.fori_loop(..., unroll=True)
    # to bound vreg live ranges.
    outs = []
    for h in range(num_heads):
        lo = h * head_dim
        q = q_all[:, q_off + lo:q_off + lo + head_dim] * scale     # (tq, hd)
        k = kv_all[:, k_off + lo:k_off + lo + head_dim]            # (S, hd)
        v = kv_all[:, v_off + lo:v_off + lo + head_dim]            # (S, hd)
        # q @ k^T folded into the MXU contraction (no XLU transpose).
        s = lax.dot_general(q, k, (((1,), (1,)), ((), ())),
                            preferred_element_type=jnp.float32)    # (tq, S)
        if m is not None:
            s = s + m
        s = s - jnp.max(s, axis=-1, keepdims=True)
        p = jnp.exp(s)
        p = p * pl.reciprocal(jnp.sum(p, axis=-1, keepdims=True), approx=True)
        outs.append(jnp.dot(p.astype(v.dtype), v,
                            preferred_element_type=jnp.float32))   # (tq, hd)

    out = jnp.concatenate(outs, axis=-1)                           # (tq, D)
    o_ref[0] = out.astype(o_ref.dtype)                             # single lane-dense store


def self_attention(qkv_bm, attn_mask, num_heads):
    """qkv_bm: (B, T, 3D) fused q|k|v; attn_mask: (T, T) additive (f32).
    Grid = (B, T//tq), both parallel. Returns concatenated head outputs (B, T, D)."""
    B, T, W = qkv_bm.shape
    D = W // 3
    hd = D // num_heads
    tq = _pick_divisor_tile(T)
    return pl.pallas_call(
        functools.partial(_attn_kernel, num_heads=num_heads, head_dim=hd,
                          scale=hd ** -0.5, q_off=0, k_off=D, v_off=2 * D,
                          has_amask=True, has_pad=False),
        out_shape=jax.ShapeDtypeStruct((B, T, D), qkv_bm.dtype),
        grid=(B, T // tq),
        in_specs=[
            pl.BlockSpec((1, tq, W), lambda b, qi: (b, qi, 0)),   # query rows
            pl.BlockSpec((1, T, W), lambda b, qi: (b, 0, 0)),     # full K|V rows
            pl.BlockSpec((tq, T), lambda b, qi: (qi, 0)),
        ],
        out_specs=pl.BlockSpec((1, tq, D), lambda b, qi: (b, qi, 0)),
        compiler_params=_PAR2,
    )(qkv_bm, qkv_bm, attn_mask)


def cross_attention(q_bm, kv_bm, pad_mask, num_heads, kv_col, attn_mask=None):
    """q_bm: (B, T, D); kv_bm: (B, S, k*2D) fused k|v stacks, the 2D-wide column
    block `kv_col` is selected via the BlockSpec (no HBM slice); pad_mask:
    (B, 1, S) additive f32; attn_mask: optional (T, S) additive f32."""
    B, T, D = q_bm.shape
    S = kv_bm.shape[1]
    Wkv = 2 * D
    hd = D // num_heads
    tq = _pick_divisor_tile(T)
    has_amask = attn_mask is not None

    in_specs = [
        pl.BlockSpec((1, tq, D), lambda b, qi: (b, qi, 0)),
        pl.BlockSpec((1, S, Wkv), lambda b, qi: (b, 0, kv_col)),
    ]
    args = [q_bm, kv_bm]
    if has_amask:
        in_specs.append(pl.BlockSpec((tq, S), lambda b, qi: (qi, 0)))
        args.append(attn_mask)
    in_specs.append(pl.BlockSpec((1, 1, S), lambda b, qi: (b, 0, 0)))
    args.append(pad_mask)

    return pl.pallas_call(
        functools.partial(_attn_kernel, num_heads=num_heads, head_dim=hd,
                          scale=hd ** -0.5, q_off=0, k_off=0, v_off=D,
                          has_amask=has_amask, has_pad=True),
        out_shape=jax.ShapeDtypeStruct((B, T, D), q_bm.dtype),
        grid=(B, T // tq),
        in_specs=in_specs,
        out_specs=pl.BlockSpec((1, tq, D), lambda b, qi: (b, qi, 0)),
        compiler_params=_PAR2,
    )(*args)


# ------------------------------- layer forward -------------------------------

def transformer_layer_forward(x, encoder_out, encoder_padding_mask,
                              self_attn_mask, mention_mask_src,
                              mention_or_not, mention_tag_idx,
                              params, num_heads):
    T, B, D = x.shape
    S = encoder_out.shape[0]
    N = B * T

    # Batch-major layout for lane-dense (rows, D) slabs; transposed back at exit.
    x_bm = jnp.transpose(x, (1, 0, 2))                 # (B, T, D)
    enc_bm = jnp.transpose(encoder_out, (1, 0, 2))     # (B, S, D)
    x_flat = x_bm.reshape(N, D)
    enc_flat = enc_bm.reshape(B * S, D)

    # Small raw additive masks (no (B*H,T,S) broadcasts in HBM).
    pad_add = jnp.where(encoder_padding_mask, NEG_INF, 0.0).astype(jnp.float32)[:, None, :]
    self_amask = self_attn_mask.astype(jnp.float32)            # (T, T)
    mention_amask = mention_mask_src.astype(jnp.float32)       # (T, S)
    # TODO(synk): self_attn_padding_mask is not supported (reference passes None here).

    # ---------------- self-attention block (post-norm) ----------------
    residual = x_flat
    sa = params["self_attn"]
    qkv = linear(x_flat, sa["wqkv"], sa["bqkv"])                            # (N, 3D)
    attn_o = self_attention(qkv.reshape(B, T, 3 * D), self_amask, num_heads)
    x1 = proj_add_layernorm(attn_o.reshape(N, D), sa["wo"], sa["bo"], residual,
                            params["self_ln_g"], params["self_ln_b"])

    # -------- encoder attention + NE head + mention attention --------
    residual = x1
    ea, ma = params["enc_attn"], params["mention_attn"]

    # NE head padded to 128-lane hidden/output (lane-dense stores); sliced back below.
    P = params["ne_w1"].shape[1]
    V = params["ne_w2"].shape[1]
    Pp, Vp = _round_up(P, 128), _round_up(V, 128)
    ne_w1 = jnp.pad(params["ne_w1"], ((0, 0), (0, Pp - P)))
    ne_b1 = jnp.pad(params["ne_b1"], ((0, 0), (0, Pp - P)))
    ne_w2 = jnp.pad(params["ne_w2"], ((0, Pp - P), (0, Vp - V)))
    ne_b2 = jnp.pad(params["ne_b2"], ((0, 0), (0, Vp - V)))

    # Fusion (b): enc-attn Q projection + NE-tag head in one pass over x1.
    q_enc, ne_pad = q_proj_and_ne_head(x1, ea["wq"], ea["bq"],
                                       ne_w1, ne_b1, ne_w2, ne_b2)
    ne_logits = ne_pad[:, :V].reshape(B, T, V)                              # (B, T, V)

    # Fusion (a): enc-attn K|V and mention-attn K|V in one (D, 4D) projection.
    kv4 = linear(enc_flat, params["kv4_w"], params["kv4_b"]).reshape(B, S, 4 * D)
    if (2 * D) % 128 == 0:
        kv_enc_arr, enc_col = kv4, 0
        kv_men_arr, men_col = kv4, 1
    else:  # column block not 128-aligned -> fall back to XLA slices
        kv_enc_arr, enc_col = kv4[:, :, :2 * D], 0
        kv_men_arr, men_col = kv4[:, :, 2 * D:], 0

    ctx_o = cross_attention(q_enc.reshape(B, T, D), kv_enc_arr, pad_add,
                            num_heads, kv_col=enc_col, attn_mask=None)

    # Fusion (c): enc-attn out-projection + mention-attn Q projection.
    x_ctx, q_men = proj_then_proj(ctx_o.reshape(N, D), ea["wo"], ea["bo"],
                                  ma["wq"], ma["bq"])

    men_o = cross_attention(q_men.reshape(B, T, D), kv_men_arr, pad_add,
                            num_heads, kv_col=men_col, attn_mask=mention_amask)

    if mention_or_not is None:
        cond = (jnp.argmax(ne_logits, axis=-1) == mention_tag_idx)          # (B, T)
    else:
        # reference builds (T,B,D) by repeating a per-token decision over D.
        cond = jnp.transpose(mention_or_not[..., 0], (1, 0))                # (B, T)
    cond_col = cond.reshape(N, 1).astype(jnp.int32)

    x2 = proj_select_add_layernorm(men_o.reshape(N, D), ma["wo"], ma["bo"],
                                   cond_col, x_ctx, residual,
                                   params["enc_ln_g"], params["enc_ln_b"])

    # ---------------- feed-forward block (fully fused) ----------------
    x3 = ffn_add_layernorm(x2, params["fc1_w"], params["fc1_b"],
                           params["fc2_w"], params["fc2_b"],
                           params["final_ln_g"], params["final_ln_b"])

    x_out = jnp.transpose(x3.reshape(B, T, D), (1, 0, 2))                    # (T, B, D)
    attn = None  # self_attn called with need_weights=False -> attn is None
    return x_out, attn, ne_logits


# --------------------------------- main --------------------------------------

if __name__ == "__main__":
    T, B, D = 8, 2, 64          # tgt seq, batch, decoder_embed_dim
    S = 16                      # src seq
    H = 4                       # decoder_attention_heads
    FFN = 128                   # decoder_ffn_embed_dim
    NE_PROJ = 16                # args.tgt_ne_project
    NE_VOCAB = 8                # len(ne_dict)
    MENTION_TAG_IDX = 3
    DTYPE = jnp.bfloat16        # bf16 activations/weights; f32 accumulation & stats

    key = jax.random.PRNGKey(0)
    ks = jax.random.split(key, 16)

    def dense(k, din, dout):
        w = (jax.random.normal(k, (din, dout), jnp.float32) * 0.02).astype(DTYPE)
        b = jnp.zeros((1, dout), jnp.float32)
        return w, b

    sa_wqkv, sa_bqkv = dense(ks[0], D, 3 * D)     # fused q|k|v projection
    sa_wo, sa_bo = dense(ks[1], D, D)
    ea_wq, ea_bq = dense(ks[2], D, D)
    ea_wkv, ea_bkv = dense(ks[3], D, 2 * D)
    ea_wo, ea_bo = dense(ks[4], D, D)
    ma_wq, ma_bq = dense(ks[5], D, D)
    ma_wkv, ma_bkv = dense(ks[6], D, 2 * D)
    ma_wo, ma_bo = dense(ks[7], D, D)

    params = dict(
        self_attn=dict(wqkv=sa_wqkv, bqkv=sa_bqkv, wo=sa_wo, bo=sa_bo),
        enc_attn=dict(wq=ea_wq, bq=ea_bq, wo=ea_wo, bo=ea_bo),
        mention_attn=dict(wq=ma_wq, bq=ma_bq, wo=ma_wo, bo=ma_bo),
        # fused encoder-attn + mention-attn K|V projection weights (review item a)
        kv4_w=jnp.concatenate([ea_wkv, ma_wkv], axis=1),
        kv4_b=jnp.concatenate([ea_bkv, ma_bkv], axis=1),
        self_ln_g=jnp.ones((1, D), jnp.float32), self_ln_b=jnp.zeros((1, D), jnp.float32),
        enc_ln_g=jnp.ones((1, D), jnp.float32), enc_ln_b=jnp.zeros((1, D), jnp.float32),
        final_ln_g=jnp.ones((1, D), jnp.float32), final_ln_b=jnp.zeros((1, D), jnp.float32),
    )
    params["ne_w1"], params["ne_b1"] = dense(ks[8], D, NE_PROJ)
    params["ne_w2"], params["ne_b2"] = dense(ks[9], NE_PROJ, NE_VOCAB)
    params["fc1_w"], params["fc1_b"] = dense(ks[10], D, FFN)
    params["fc2_w"], params["fc2_b"] = dense(ks[11], FFN, D)

    x = jax.random.normal(ks[12], (T, B, D), jnp.float32).astype(DTYPE)         # (seq, batch, embed)
    encoder_out = jax.random.normal(ks[13], (S, B, D), jnp.float32).astype(DTYPE)
    encoder_padding_mask = jnp.zeros((B, S), dtype=bool).at[:, S - 2:].set(True)

    # causal self-attention mask (additive, fairseq buffered_future_mask style)
    causal = jnp.where(jnp.triu(jnp.ones((T, T), bool), k=1), NEG_INF, 0.0).astype(jnp.float32)
    # additive mention mask over source positions (0 = allowed, NEG_INF = blocked)
    mention_mask_src = jnp.where(
        jax.random.bernoulli(ks[14], 0.3, (T, S)), NEG_INF, 0.0).astype(jnp.float32)

    out, attn, ne_logits = transformer_layer_forward(
        x, encoder_out, encoder_padding_mask, causal, mention_mask_src,
        None, MENTION_TAG_IDX, params, H)

    jax.block_until_ready(out)
    jax.block_until_ready(ne_logits)
    assert out.shape == (T, B, D)
    assert ne_logits.shape == (B, T, NE_VOCAB)
    print("KERNEL_OK")
</pallas_src>

<mosaic_0001>
module attributes {stable_mosaic.version = 11 : i64} {
  func.func @_linear_kernel(%arg0: i32, %arg1: memref<16x64xbf16, #tpu.memory_space<vmem>>, %arg2: memref<64x192xbf16, #tpu.memory_space<vmem>>, %arg3: memref<1x192xf32, #tpu.memory_space<vmem>>, %arg4: memref<16x192xbf16, #tpu.memory_space<vmem>>) attributes {dimension_semantics = [#tpu.dimension_semantics<parallel>], iteration_bounds = array<i64: 1>, scalar_prefetch = 0 : i64, scratch_operands = 0 : i64, tpu.core_type = #tpu.core_type<tc>, window_params = [{transform_indices = @transform_0, window_bounds = array<i64: 16, 64>}, {pipeline_mode = #tpu.pipeline_mode<synchronous>, transform_indices = @transform_1, window_bounds = array<i64: 64, 192>}, {pipeline_mode = #tpu.pipeline_mode<synchronous>, transform_indices = @transform_2, window_bounds = array<i64: 1, 192>}, {transform_indices = @transform_3, window_bounds = array<i64: 16, 192>}]} {
    %c0 = arith.constant 0 : index
    %c0_0 = arith.constant 0 : index
    %0 = vector.load %arg1[%c0, %c0_0] : memref<16x64xbf16, #tpu.memory_space<vmem>>, vector<16x64xbf16>
    %c0_1 = arith.constant 0 : index
    %c0_2 = arith.constant 0 : index
    %1 = vector.load %arg2[%c0_1, %c0_2] : memref<64x192xbf16, #tpu.memory_space<vmem>>, vector<64x192xbf16>
    %cst = arith.constant dense<0.000000e+00> : vector<16x192xf32>
    %2 = tpu.matmul %0, %1, %cst {dimension_numbers = #tpu.dot_dimension_numbers<[1], [0], [0], [1], [0, 0, 1, 1], [], []>} : vector<16x64xbf16>, vector<64x192xbf16>, vector<16x192xf32> -> vector<16x192xf32>
    %c0_3 = arith.constant 0 : index
    %c0_4 = arith.constant 0 : index
    %3 = vector.load %arg3[%c0_3, %c0_4] : memref<1x192xf32, #tpu.memory_space<vmem>>, vector<1x192xf32>
    %4 = vector.broadcast %3 : vector<1x192xf32> to vector<16x192xf32>
    %5 = arith.addf %2, %4 : vector<16x192xf32>
    %6 = arith.truncf %5 : vector<16x192xf32> to vector<16x192xbf16>
    %c0_5 = arith.constant 0 : index
    %c0_6 = arith.constant 0 : index
    %7 = vector.load %arg4[%c0_5, %c0_6] : memref<16x192xbf16, #tpu.memory_space<vmem>>, vector<16x192xbf16>
    tpu.vector_store %arg4[%c0_5, %c0_6], %6 {strides = array<i32>} : memref<16x192xbf16, #tpu.memory_space<vmem>>, vector<16x192xbf16>,
    return
  }
  func.func @transform_0(%arg0: i32) -> (i32, i32) {
    %c0_i32 = arith.constant 0 : i32
    %c0_i32_0 = arith.constant 0 : i32
    return %arg0, %c0_i32 : i32, i32
  }
  func.func @transform_1(%arg0: i32) -> (i32, i32) {
    %c0_i32 = arith.constant 0 : i32
    %c0_i32_0 = arith.constant 0 : i32
    %c0_i32_1 = arith.constant 0 : i32
    return %c0_i32, %c0_i32_0 : i32, i32
  }
  func.func @transform_2(%arg0: i32) -> (i32, i32) {
    %c0_i32 = arith.constant 0 : i32
    %c0_i32_0 = arith.constant 0 : i32
    %c0_i32_1 = arith.constant 0 : i32
    return %c0_i32, %c0_i32_0 : i32, i32
  }
  func.func @transform_3(%arg0: i32) -> (i32, i32) {
    %c0_i32 = arith.constant 0 : i32
    %c0_i32_0 = arith.constant 0 : i32
    return %arg0, %c0_i32 : i32, i32
  }
}

</mosaic_0001>

<llo_original>
// kernel: tpu_custom_call.1
$region0: #{tpu_custom_call.1}
  #allocation0 [shape = 'u32[]', space=smem, size = 0x4, offset = 0x4, fixed_abs, tag = 'smem constant byte address 0x4 - core index']
  #allocation1 [shape = 'u32[144,128]{1,0:T(1,128)}', space=vmem, size = 0x12000, scoped, tag = 'internal scratch']
  %s0 = inlined_call_operand.hbm [shape: bf16[16,64], index: 0, kind: input, shape index: {}]
  %s1 = inlined_call_operand.hbm [shape: bf16[64,192], index: 1, kind: input, shape index: {}]
  %s2 = inlined_call_operand.vmem [shape: f32[1,192], index: 2, kind: input, shape index: {}]
  %s3 = inlined_call_operand.hbm [shape: bf16[16,192], index: 3, kind: output, shape index: {}]
  %s4 = sld [smem:[#allocation0]]
  $region30: #{tpu_custom_call.1} parent=0
    _
  %s6 = ssub.s32 1, %s4
  %s7 = scalar_select 0, %s6, %s4
  $region1: #{tpu_custom_call.1} parent=0
    #allocation2 [shape = 'u8[4096]{0}', space=vmem, size = 0x1000, scoped, tag = 'input window, operand 0, single buffered']
    #allocation3 [shape = 's32[1]{0}', space=sflag, size = 0x4, scoped, tag = 'scoped memory for tpu_custom_call.1']
    #allocation4 [shape = 's32[1]{0}', space=sflag, size = 0x4, scoped, tag = 'scoped memory for tpu_custom_call.1']
    #allocation5 [shape = 'u8[32768]{0}', space=vmem, size = 0x8000, scoped, tag = 'input window, operand 1, single buffered']
    #allocation6 [shape = 's32[1]{0}', space=sflag, size = 0x4, scoped, tag = 'scoped memory for tpu_custom_call.1']
    #allocation7 [shape = 'u8[8192]{0}', space=vmem, size = 0x2000, scoped, tag = 'output window, operand 0, single buffered']
    %8 = vsyncpa [#allocation3], 0
    %9 = vsyncpa [#allocation6], 0
    %10 = vsyncpa [#allocation4], 0
    // Predicated region
    $region2: #{tpu_custom_call.1} parent=1 // pred_check
      _
    $region3: #{tpu_custom_call.1} parent=1 // pred_check_branch
      %12 = sbr.rel (0) target = $region5
    $region4: #{tpu_custom_call.1} parent=1 // pred_region
      %s14 = ssub.s32 128, 128
      %15 = vsyncadd [#allocation3], %s14
      %s16 = sshll.u32 [#allocation2], 4
      %s17 = int_to_ptr.vmem [resolvable:$true] %s16
      %22 = dma.hbm_to_vmem [thread:$0]  %s0, 128, %s17, [#allocation3], 64, 64, 4
    $region5: #{tpu_custom_call.1} parent=1 // pred_fallthru
      _
    // Predicated region
    $region6: #{tpu_custom_call.1} parent=1 // pred_check
      _
    $region7: #{tpu_custom_call.1} parent=1 // pred_check_branch
      %24 = sbr.rel (0) target = $region9
    $region8: #{tpu_custom_call.1} parent=1 // pred_region
      %s26 = ssub.s32 1024, 1024
      %27 = vsyncadd [#allocation6], %s26
      %s28 = sshll.u32 [#allocation5], 4
      %s29 = int_to_ptr.vmem [resolvable:$true] %s28
      %34 = dma.hbm_to_vmem [thread:$0]  %s1, 1024, %s29, [#allocation6], 128, 128, 8
    $region9: #{tpu_custom_call.1} parent=1 // pred_fallthru
      _
    // Predicated region
    $region10: #{tpu_custom_call.1} parent=1 // pred_check
      _
    $region11: #{tpu_custom_call.1} parent=1 // pred_check_branch
      %36 = sbr.rel (0) target = $region13
    $region12: #{tpu_custom_call.1} parent=1 // pred_region
      _
    $region13: #{tpu_custom_call.1} parent=1 // pred_fallthru
      _
    // Predicated region
    $region14: #{tpu_custom_call.1} parent=1 // pred_check
      _
    $region15: #{tpu_custom_call.1} parent=1 // pred_check_branch
      %38 = sbr.rel (0) target = $region17
    $region16: #{tpu_custom_call.1} parent=1 // pred_region
      %39 = dma.done [#allocation3], 128
    $region17: #{tpu_custom_call.1} parent=1 // pred_fallthru
      _
    // Predicated region
    $region18: #{tpu_custom_call.1} parent=1 // pred_check
      _
    $region19: #{tpu_custom_call.1} parent=1 // pred_check_branch
      %41 = sbr.rel (0) target = $region21
    $region20: #{tpu_custom_call.1} parent=1 // pred_region
      %42 = dma.done [#allocation6], 1024
    $region21: #{tpu_custom_call.1} parent=1 // pred_fallthru
      _
    %v44 = vld [vmem:[#allocation2] sm:$0xf]
    %v45 = vld [vmem:[#allocation2 + $0x4] sm:$0xf]
    %v46 = vld [vmem:[#allocation5] sm:$0xff]
    %v47 = vld [vmem:[#allocation5 + $0x8] sm:$0xff]
    %v48 = vld [vmem:[#allocation5 + $0x10] sm:$0xff]
    %v49 = vld [vmem:[#allocation5 + $0x18] sm:$0xff]
    %v50 = vld [vmem:[#allocation5 + $0x20] sm:$0xff]
    %v51 = vld [vmem:[#allocation5 + $0x28] sm:$0xff]
    %v52 = vld [vmem:[#allocation5 + $0x30] sm:$0xff]
    %v53 = vld [vmem:[#allocation5 + $0x38] sm:$0xff]
    %v54 = vld [vmem:[%s2] sm:$0x3]
    %v56 = vlaneseq
    %v57 = vshrl.u32 %v56, 7
    %v58 = vsub.s32 0, %v57
    %v59 = vrot.slane %v54, %v58
    %v60 = vlaneseq
    %v61 = vshrl.u32 %v60, 7
    %v62 = vsub.s32 1, %v61
    %v63 = vrot.slane %v54, %v62
    %v68 = vunpack.c.l.b16 %v44
    %v69 = vunpack.c.l.b16 %v45
    %v70 = vpack.c.b16 %v69, %v68
    %v79 = vunpack.c.l.b16 %v46
    %v80 = vunpack.c.h.b16 %v46
    %v81 = vunpack.c.l.b16 %v47
    %v82 = vunpack.c.h.b16 %v47
    %v83 = vunpack.c.l.b16 %v48
    %v84 = vunpack.c.h.b16 %v48
    %v85 = vunpack.c.l.b16 %v49
    %v86 = vunpack.c.h.b16 %v49
    %v87 = vunpack.c.l.b16 %v50
    %v88 = vunpack.c.h.b16 %v50
    %v89 = vunpack.c.l.b16 %v51
    %v90 = vunpack.c.h.b16 %v51
    %v91 = vunpack.c.l.b16 %v52
    %v92 = vunpack.c.h.b16 %v52
    %v93 = vunpack.c.l.b16 %v53
    %v94 = vunpack.c.h.b16 %v53
    %v95 = vpack.c.b16 %v81, %v79
    %v96 = vpack.c.b16 %v82, %v80
    %v97 = vpack.c.b16 %v85, %v83
    %v98 = vpack.c.b16 %v86, %v84
    %v99 = vpack.c.b16 %v89, %v87
    %v100 = vpack.c.b16 %v90, %v88
    %v101 = vpack.c.b16 %v93, %v91
    %v102 = vpack.c.b16 %v94, %v92
    %vm111 = vcmask 523264
    %v113 = vsel %vm111, %v70, 0
    %115 = vmatprep.subr.bf16.mxu0 %v96
    %116 = vmatpush1.bf16.msra.mxu0 %v95
    %117 = vmatprep.subr.bf16.mxu0 %v98
    %118 = vmatpush1.bf16.msra.mxu0 %v97
    %119 = vmatprep.subr.bf16.mxu0 %v100
    %120 = vmatpush1.bf16.msra.mxu0 %v99
    %121 = vmatprep.subr.bf16.mxu0 %v102
    %122 = vmatpush1.bf16.msra.mxu0 %v101
    %123 = vmatprep.subr.bf16.mxu0 0
    %124 = vmatpush1.bf16.msra.mxu0 0
    %125 = vmatprep.subr.bf16.mxu0 0
    %126 = vmatpush1.bf16.msra.mxu0 0
    %127 = vmatprep.subr.bf16.mxu0 0
    %128 = vmatpush1.bf16.msra.mxu0 0
    %129 = vmatprep.subr.bf16.mxu0 0
    %130 = vmatpush1.bf16.msra.mxu0 0
    %131 = vmatprep.subr.bf16.mxu0 0
    %132 = vmatpush1.bf16.msra.mxu0 0
    %133 = vmatprep.subr.bf16.mxu0 0
    %134 = vmatpush1.bf16.msra.mxu0 0
    %135 = vmatprep.subr.bf16.mxu0 0
    %136 = vmatpush1.bf16.msra.mxu0 0
    %137 = vmatprep.subr.bf16.mxu0 0
    %138 = vmatpush1.bf16.msra.mxu0 0
    %139 = vmatprep.subr.bf16.mxu0 0
    %140 = vmatpush1.bf16.msra.mxu0 0
    %141 = vmatprep.subr.bf16.mxu0 0
    %142 = vmatpush1.bf16.msra.mxu0 0
    %143 = vmatprep.subr.bf16.mxu0 0
    %144 = vmatpush1.bf16.msra.mxu0 0
    %145 = vmatprep.subr.bf16.mxu0 0
    %146 = vmatpush1.bf16.msra.mxu0 0
    %147 = vmatprep.mubr.bf16.mxu0 0
    %148 = vmatmul.mubr.bf16.gmra.mrb[0].mxu0 %v113
    %v149 = vpop.f32.mrb[0].mxu0
    %v150 = vadd.f32 %v59, %v149
    %v151 = vpop.f32.mrb[0].mxu0
    %v152 = vadd.f32 %v63, %v151
    %v153 = vpop.f32.mrb[0].mxu0
    %v154 = vadd.f32 %v59, %v153
    %v155 = vpop.f32.mrb[0].mxu0
    %v156 = vadd.f32 %v63, %v155
    %157 = vdwg.mxu0
    %v158 = vpack.c.bf16 %v154, %v150
    %v159 = vpack.c.bf16 %v156, %v152
    %v162 = vunpack.c.l.b16 %v158
    %v163 = vunpack.c.l.b16 %v159
    %v164 = vunpack.c.h.b16 %v158
    %v165 = vunpack.c.h.b16 %v159
    %v166 = vpack.c.b16 %v163, %v162
    %v167 = vpack.c.b16 %v165, %v164
    %vm170 = vcmask 1043456
    %vm171 = vcmask 523268
    %vm172 = vmor %vm171, %vm170
    %173 = vst.msk [vmem:[#allocation7] sm:$0xff] %vm172, %v166
    %174 = vst.msk [vmem:[#allocation7 + $0x8] sm:$0xff] %vm172, %v167
    // Predicated region
    $region22: #{tpu_custom_call.1} parent=1 // pred_check
      _
    $region23: #{tpu_custom_call.1} parent=1 // pred_check_branch
      %176 = sbr.rel (0) target = $region25
    $region24: #{tpu_custom_call.1} parent=1 // pred_region
      %s178 = ssub.s32 256, 256
      %179 = vsyncadd [#allocation4], %s178
      %s180 = sshll.u32 [#allocation7], 4
      %s181 = int_to_ptr.vmem [resolvable:$true] %s180
      %186 = dma.vmem_to_hbm [thread:$0]  %s181, 256, %s3, [#allocation4], 128, 128, 8
    $region25: #{tpu_custom_call.1} parent=1 // pred_fallthru
      _
    // Predicated region
    $region26: #{tpu_custom_call.1} parent=1 // pred_check
      _
    $region27: #{tpu_custom_call.1} parent=1 // pred_check_branch
      %188 = sbr.rel (0) target = $region29
    $region28: #{tpu_custom_call.1} parent=1 // pred_region
      %189 = dma.done [#allocation4], 256
    $region29: #{tpu_custom_call.1} parent=1 // pred_fallthru
      _
    %190 = vsyncpa [#allocation3], 1
    %191 = vsyncpa [#allocation6], 1
    %192 = vsyncpa [#allocation4], 1

</llo_original>
